<compile_context>
chip_gen: v6e
topology: v6e:2x2x1
jax: 0.10.0
libtpu: 0.0.40
codegen_flags: <defaults>
</compile_context>

<pallas_src>
import functools

import jax
import jax.numpy as jnp
from jax import lax
from jax.experimental import pallas as pl
from jax.experimental.pallas import tpu as pltpu


def _ffnn_kernel(x_ref, w1_ref, w2_ref, w3_ref, pk_ref, o_ref):
    """Fused MLP for one batch tile, computed transposed (batch on lanes).

    x_ref  : (bb, D_in) f32   -- raw batch tile, no wrapper relayout
    w{1..3}: PyTorch-layout (out, in) f32 weights
    pk_ref : (H, 5) f32       -- packed [b1 | b2 | b3 | wo | bo] columns
    o_ref  : (1, bb) f32      -- sigmoid(logits)^T, lane-dense
    """
    pk = pk_ref[...]
    b1 = pk[:, 0:1]
    b2 = pk[:, 1:2]
    b3 = pk[:, 2:3]
    wo = pk[:, 3:4]
    bo = pk[0:1, 4:5]

    # Layer 1: (H, D_in) contracted with (bb, D_in) on dim 1 -> (H, bb).
    # This is the q @ k^T pattern; the relayout rides the MXU/XLU.
    h = lax.dot_general(w1_ref[...], x_ref[...],
                        dimension_numbers=(((1,), (1,)), ((), ())),
                        preferred_element_type=jnp.float32)
    h = jnp.maximum(h + b1, 0.0)

    # Layer 2: (H, H) @ (H, bb) -> (H, bb)
    h = jnp.dot(w2_ref[...], h, preferred_element_type=jnp.float32)
    h = jnp.maximum(h + b2, 0.0)

    # Layer 3
    h = jnp.dot(w3_ref[...], h, preferred_element_type=jnp.float32)
    h = jnp.maximum(h + b3, 0.0)

    # Output layer (out_features == 1): VPU multiply + XLU sublane reduction
    # instead of a single-column MXU matmul.
    logits = jnp.sum(h * wo, axis=0, keepdims=True) + bo

    # Sigmoid on the EUP: exp + approximate reciprocal (idle slot, VALU stays free).
    o_ref[...] = pl.reciprocal(1.0 + jnp.exp(-logits), approx=True)


def _pick_block(B, block_b):
    """Choose the batch tile size.  Multi-tile sizes are 256-aligned."""
    if block_b is not None:
        bb = min(int(block_b), B)
        if bb < B:
            assert bb % 128 == 0, "block_b must be a multiple of 128 when B > block_b"
        return bb
    if B <= 512:
        return B  # single full-array tile; no alignment constraint
    # >= 2 grid steps (v7x megacore), 256-aligned (v6e/v7x MXU), capped at 4096.
    half = -(-(-(-B // 2)) // 256) * 256  # cdiv(cdiv(B, 2), 256) * 256
    return max(256, min(4096, half))


@functools.partial(jax.jit, static_argnames=("block_b",))
def ffnn_forward(x, params, block_b=None):
    """x: (B, D_in) f32.  params: PyTorch layout (w: (out,in), b: (out,)).

    Returns (B, 1) f32 = sigmoid(Linear(ReLU(Linear(ReLU(Linear(ReLU(Linear(x)))))))).
    """
    B, D_in = x.shape
    H = params["w1"].shape[0]

    bb = _pick_block(B, block_b)
    num_tiles = pl.cdiv(B, bb)

    w1 = params["w1"].astype(jnp.float32)    # (H, D_in)
    w2 = params["w2"].astype(jnp.float32)    # (H, H)
    w3 = params["w3"].astype(jnp.float32)    # (H, H)

    # Pack the five tiny vectors into a single resident (H, 5) operand:
    # columns = [b1, b2, b3, wo, bo(broadcast)].
    pk = jnp.stack(
        [params["b1"], params["b2"], params["b3"],
         params["wo"].reshape(H),
         jnp.broadcast_to(params["bo"].reshape(()), (H,))],
        axis=1).astype(jnp.float32)          # (H, 5)

    def resident(shape):  # full-array block pinned at (0, 0) -> stays in VMEM
        return pl.BlockSpec(shape, lambda i: (0, 0))

    out_row = pl.pallas_call(
        _ffnn_kernel,
        out_shape=jax.ShapeDtypeStruct((1, B), jnp.float32),
        grid_spec=pltpu.PrefetchScalarGridSpec(
            num_scalar_prefetch=0,
            grid=(num_tiles,),
            in_specs=[
                pl.BlockSpec((bb, D_in), lambda i: (i, 0)),  # x batch tile
                resident((H, D_in)),                         # w1
                resident((H, H)),                            # w2
                resident((H, H)),                            # w3
                resident((H, 5)),                            # packed b1,b2,b3,wo,bo
            ],
            out_specs=pl.BlockSpec((1, bb), lambda i: (0, i)),  # lane-dense row
        ),
        compiler_params=pltpu.CompilerParams(
            dimension_semantics=("parallel",)),
    )(x.astype(jnp.float32), w1, w2, w3, pk)

    # (1, B) -> (B, 1): pure metadata reshape, no data movement.
    return out_row.reshape(B, 1)


def init_params(key, input_size, hidden_size):
    """PyTorch nn.Linear-style init: W ~ U(+-1/sqrt(fan_in)), shapes (out, in)."""
    ks = jax.random.split(key, 8)

    def lin(kw, kb, fan_in, fan_out):
        bound = 1.0 / float(fan_in) ** 0.5
        w = jax.random.uniform(kw, (fan_out, fan_in), jnp.float32, -bound, bound)
        b = jax.random.uniform(kb, (fan_out,), jnp.float32, -bound, bound)
        return w, b

    w1, b1 = lin(ks[0], ks[1], input_size, hidden_size)
    w2, b2 = lin(ks[2], ks[3], hidden_size, hidden_size)
    w3, b3 = lin(ks[4], ks[5], hidden_size, hidden_size)
    wo, bo = lin(ks[6], ks[7], hidden_size, 1)
    return {"w1": w1, "b1": b1, "w2": w2, "b2": b2,
            "w3": w3, "b3": b3, "wo": wo, "bo": bo}


def ffnn_reference(x, p):
    """Pure-f32 reference with PyTorch semantics (x @ W.T + b)."""
    h = jnp.maximum(x @ p["w1"].T + p["b1"], 0.0)
    h = jnp.maximum(h @ p["w2"].T + p["b2"], 0.0)
    h = jnp.maximum(h @ p["w3"].T + p["b3"], 0.0)
    return jax.nn.sigmoid(h @ p["wo"].T + p["bo"])


if __name__ == "__main__":
    key = jax.random.PRNGKey(0)
    k_x, k_p = jax.random.split(key)

    input_size, hidden_size = 16, 32
    params = init_params(k_p, input_size, hidden_size)

    # Small batch: single full-array tile.
    batch = 64
    x = jax.random.normal(k_x, (batch, input_size), jnp.float32)
    ref = ffnn_reference(x, params)
    out = jax.block_until_ready(ffnn_forward(x, params))
    assert out.shape == (batch, 1), out.shape
    err = float(jnp.max(jnp.abs(out - ref)))
    assert err < 2e-2, f"mismatch vs reference: max abs err {err}"

    # Multi-tile path: 2 parallel grid steps with a masked partial trailing block.
    batch2 = 1000
    x2 = jax.random.normal(k_x, (batch2, input_size), jnp.float32)
    ref2 = ffnn_reference(x2, params)
    out2 = jax.block_until_ready(ffnn_forward(x2, params))
    assert out2.shape == (batch2, 1), out2.shape
    err2 = float(jnp.max(jnp.abs(out2 - ref2)))
    assert err2 < 2e-2, f"multi-tile mismatch: max abs err {err2}"

    print("KERNEL_OK")
</pallas_src>

<mosaic_0001>
module attributes {stable_mosaic.version = 11 : i64} {
  func.func @_ffnn_kernel(%arg0: i32, %arg1: memref<64x16xf32, #tpu.memory_space<vmem>>, %arg2: memref<32x16xf32, #tpu.memory_space<vmem>>, %arg3: memref<32x32xf32, #tpu.memory_space<vmem>>, %arg4: memref<32x32xf32, #tpu.memory_space<vmem>>, %arg5: memref<32x5xf32, #tpu.memory_space<vmem>>, %arg6: memref<1x64xf32, #tpu.memory_space<vmem>>) attributes {dimension_semantics = [#tpu.dimension_semantics<parallel>], iteration_bounds = array<i64: 1>, scalar_prefetch = 0 : i64, scratch_operands = 0 : i64, tpu.core_type = #tpu.core_type<tc>, window_params = [{transform_indices = @transform_0, window_bounds = array<i64: 64, 16>}, {pipeline_mode = #tpu.pipeline_mode<synchronous>, transform_indices = @transform_1, window_bounds = array<i64: 32, 16>}, {pipeline_mode = #tpu.pipeline_mode<synchronous>, transform_indices = @transform_2, window_bounds = array<i64: 32, 32>}, {pipeline_mode = #tpu.pipeline_mode<synchronous>, transform_indices = @transform_3, window_bounds = array<i64: 32, 32>}, {pipeline_mode = #tpu.pipeline_mode<synchronous>, transform_indices = @transform_4, window_bounds = array<i64: 32, 5>}, {transform_indices = @transform_5, window_bounds = array<i64: 1, 64>}]} {
    %c0 = arith.constant 0 : index
    %c0_0 = arith.constant 0 : index
    %0 = vector.load %arg5[%c0, %c0_0] : memref<32x5xf32, #tpu.memory_space<vmem>>, vector<32x5xf32>
    %1 = vector.extract_strided_slice %0 {offsets = [0, 0], sizes = [32, 1], strides = [1, 1]} : vector<32x5xf32> to vector<32x1xf32>
    %2 = vector.extract_strided_slice %0 {offsets = [0, 1], sizes = [32, 1], strides = [1, 1]} : vector<32x5xf32> to vector<32x1xf32>
    %3 = vector.extract_strided_slice %0 {offsets = [0, 2], sizes = [32, 1], strides = [1, 1]} : vector<32x5xf32> to vector<32x1xf32>
    %4 = vector.extract_strided_slice %0 {offsets = [0, 3], sizes = [32, 1], strides = [1, 1]} : vector<32x5xf32> to vector<32x1xf32>
    %5 = vector.extract_strided_slice %0 {offsets = [0, 4], sizes = [1, 1], strides = [1, 1]} : vector<32x5xf32> to vector<1x1xf32>
    %c0_1 = arith.constant 0 : index
    %c0_2 = arith.constant 0 : index
    %6 = vector.load %arg2[%c0_1, %c0_2] : memref<32x16xf32, #tpu.memory_space<vmem>>, vector<32x16xf32>
    %c0_3 = arith.constant 0 : index
    %c0_4 = arith.constant 0 : index
    %7 = vector.load %arg1[%c0_3, %c0_4] : memref<64x16xf32, #tpu.memory_space<vmem>>, vector<64x16xf32>
    %cst = arith.constant dense<0.000000e+00> : vector<32x64xf32>
    %8 = tpu.matmul %6, %7, %cst {dimension_numbers = #tpu.dot_dimension_numbers<[1], [1], [0], [0], [0, 0, 1, 0], [], []>} : vector<32x16xf32>, vector<64x16xf32>, vector<32x64xf32> -> vector<32x64xf32>
    %9 = vector.broadcast %1 : vector<32x1xf32> to vector<32x64xf32>
    %10 = arith.addf %8, %9 : vector<32x64xf32>
    %cst_5 = arith.constant 0.000000e+00 : f32
    %11 = vector.broadcast %cst_5 : f32 to vector<32x64xf32>
    %12 = arith.maximumf %10, %11 : vector<32x64xf32>
    %c0_6 = arith.constant 0 : index
    %c0_7 = arith.constant 0 : index
    %13 = vector.load %arg3[%c0_6, %c0_7] : memref<32x32xf32, #tpu.memory_space<vmem>>, vector<32x32xf32>
    %cst_8 = arith.constant dense<0.000000e+00> : vector<32x64xf32>
    %14 = tpu.matmul %13, %12, %cst_8 {dimension_numbers = #tpu.dot_dimension_numbers<[1], [0], [0], [1], [0, 0, 1, 1], [], []>} : vector<32x32xf32>, vector<32x64xf32>, vector<32x64xf32> -> vector<32x64xf32>
    %15 = vector.broadcast %2 : vector<32x1xf32> to vector<32x64xf32>
    %16 = arith.addf %14, %15 : vector<32x64xf32>
    %cst_9 = arith.constant 0.000000e+00 : f32
    %17 = vector.broadcast %cst_9 : f32 to vector<32x64xf32>
    %18 = arith.maximumf %16, %17 : vector<32x64xf32>
    %c0_10 = arith.constant 0 : index
    %c0_11 = arith.constant 0 : index
    %19 = vector.load %arg4[%c0_10, %c0_11] : memref<32x32xf32, #tpu.memory_space<vmem>>, vector<32x32xf32>
    %cst_12 = arith.constant dense<0.000000e+00> : vector<32x64xf32>
    %20 = tpu.matmul %19, %18, %cst_12 {dimension_numbers = #tpu.dot_dimension_numbers<[1], [0], [0], [1], [0, 0, 1, 1], [], []>} : vector<32x32xf32>, vector<32x64xf32>, vector<32x64xf32> -> vector<32x64xf32>
    %21 = vector.broadcast %3 : vector<32x1xf32> to vector<32x64xf32>
    %22 = arith.addf %20, %21 : vector<32x64xf32>
    %cst_13 = arith.constant 0.000000e+00 : f32
    %23 = vector.broadcast %cst_13 : f32 to vector<32x64xf32>
    %24 = arith.maximumf %22, %23 : vector<32x64xf32>
    %25 = vector.broadcast %4 : vector<32x1xf32> to vector<32x64xf32>
    %26 = arith.mulf %24, %25 : vector<32x64xf32>
    %cst_14 = arith.constant dense<0.000000e+00> : vector<64xf32>
    %27 = vector.multi_reduction <add>, %26, %cst_14 [0] : vector<32x64xf32> to vector<64xf32>
    %28 = vector.shape_cast %27 : vector<64xf32> to vector<1x64xf32>
    %29 = vector.broadcast %5 : vector<1x1xf32> to vector<1x64xf32>
    %30 = arith.addf %28, %29 : vector<1x64xf32>
    %cst_15 = arith.constant 0.000000e+00 : f32
    %31 = vector.broadcast %cst_15 : f32 to vector<1x64xf32>
    %32 = arith.subf %31, %30 : vector<1x64xf32>
    %33 = math.exp %32 : vector<1x64xf32>
    %cst_16 = arith.constant 1.000000e+00 : f32
    %34 = vector.broadcast %cst_16 : f32 to vector<1x64xf32>
    %35 = arith.addf %34, %33 : vector<1x64xf32>
    %36 = tpu.reciprocal %35 {approx = true} : vector<1x64xf32> -> vector<1x64xf32>
    %c0_17 = arith.constant 0 : index
    %c0_18 = arith.constant 0 : index
    %37 = vector.load %arg6[%c0_17, %c0_18] : memref<1x64xf32, #tpu.memory_space<vmem>>, vector<1x64xf32>
    tpu.vector_store %arg6[%c0_17, %c0_18], %36 {strides = array<i32>} : memref<1x64xf32, #tpu.memory_space<vmem>>, vector<1x64xf32>,
    return
  }
  func.func @transform_0(%arg0: i32) -> (i32, i32) {
    %c0_i32 = arith.constant 0 : i32
    %c0_i32_0 = arith.constant 0 : i32
    return %arg0, %c0_i32 : i32, i32
  }
  func.func @transform_1(%arg0: i32) -> (i32, i32) {
    %c0_i32 = arith.constant 0 : i32
    %c0_i32_0 = arith.constant 0 : i32
    %c0_i32_1 = arith.constant 0 : i32
    return %c0_i32, %c0_i32_0 : i32, i32
  }
  func.func @transform_2(%arg0: i32) -> (i32, i32) {
    %c0_i32 = arith.constant 0 : i32
    %c0_i32_0 = arith.constant 0 : i32
    %c0_i32_1 = arith.constant 0 : i32
    return %c0_i32, %c0_i32_0 : i32, i32
  }
  func.func @transform_3(%arg0: i32) -> (i32, i32) {
    %c0_i32 = arith.constant 0 : i32
    %c0_i32_0 = arith.constant 0 : i32
    %c0_i32_1 = arith.constant 0 : i32
    return %c0_i32, %c0_i32_0 : i32, i32
  }
  func.func @transform_4(%arg0: i32) -> (i32, i32) {
    %c0_i32 = arith.constant 0 : i32
    %c0_i32_0 = arith.constant 0 : i32
    %c0_i32_1 = arith.constant 0 : i32
    return %c0_i32, %c0_i32_0 : i32, i32
  }
  func.func @transform_5(%arg0: i32) -> (i32, i32) {
    %c0_i32 = arith.constant 0 : i32
    %c0_i32_0 = arith.constant 0 : i32
    return %c0_i32, %arg0 : i32, i32
  }
}

</mosaic_0001>

<llo_original>
// kernel: ffnn_forward.1
$region0: #{ffnn_forward.1}
  #allocation0 [shape = 'u32[]', space=smem, size = 0x4, offset = 0x4, fixed_abs, tag = 'smem constant byte address 0x4 - core index']
  #allocation1 [shape = 'u32[144,128]{1,0:T(1,128)}', space=vmem, size = 0x12000, scoped, tag = 'internal scratch']
  %s0 = inlined_call_operand.vmem [shape: f32[64,16], index: 0, kind: input, shape index: {}]
  %s1 = inlined_call_operand.vmem [shape: f32[32,16], index: 1, kind: input, shape index: {}]
  %s2 = inlined_call_operand.vmem [shape: f32[32,32], index: 2, kind: input, shape index: {}]
  %s3 = inlined_call_operand.vmem [shape: f32[32,32], index: 3, kind: input, shape index: {}]
  %s4 = inlined_call_operand.vmem [shape: f32[32,5], index: 4, kind: input, shape index: {}]
  %s5 = inlined_call_operand.hbm [shape: f32[1,64], index: 5, kind: output, shape index: {}]
  %s6 = sld [smem:[#allocation0]]
  $region30: #{ffnn_forward.1} parent=0
    _
  %s8 = ssub.s32 1, %s6
  %s9 = scalar_select 0, %s8, %s6
  $region1: #{ffnn_forward.1} parent=0
    #allocation2 [shape = 'u8[512]{0}', space=vmem, size = 0x400, scoped, tag = 'output window, operand 0, single buffered']
    #allocation3 [shape = 's32[1]{0}', space=sflag, size = 0x4, scoped, tag = 'scoped memory for ffnn_forward.1']
    %10 = vsyncpa [#allocation3], 0
    // Predicated region
    $region2: #{ffnn_forward.1} parent=1 // pred_check
      _
    $region3: #{ffnn_forward.1} parent=1 // pred_check_branch
      %12 = sbr.rel (0) target = $region5
    $region4: #{ffnn_forward.1} parent=1 // pred_region
      _
    $region5: #{ffnn_forward.1} parent=1 // pred_fallthru
      _
    // Predicated region
    $region6: #{ffnn_forward.1} parent=1 // pred_check
      _
    $region7: #{ffnn_forward.1} parent=1 // pred_check_branch
      %14 = sbr.rel (0) target = $region9
    $region8: #{ffnn_forward.1} parent=1 // pred_region
      _
    $region9: #{ffnn_forward.1} parent=1 // pred_fallthru
      _
    // Predicated region
    $region10: #{ffnn_forward.1} parent=1 // pred_check
      _
    $region11: #{ffnn_forward.1} parent=1 // pred_check_branch
      %16 = sbr.rel (0) target = $region13
    $region12: #{ffnn_forward.1} parent=1 // pred_region
      _
    $region13: #{ffnn_forward.1} parent=1 // pred_fallthru
      _
    // Predicated region
    $region14: #{ffnn_forward.1} parent=1 // pred_check
      _
    $region15: #{ffnn_forward.1} parent=1 // pred_check_branch
      %18 = sbr.rel (0) target = $region17
    $region16: #{ffnn_forward.1} parent=1 // pred_region
      _
    $region17: #{ffnn_forward.1} parent=1 // pred_fallthru
      _
    // Predicated region
    $region18: #{ffnn_forward.1} parent=1 // pred_check
      _
    $region19: #{ffnn_forward.1} parent=1 // pred_check_branch
      %20 = sbr.rel (0) target = $region21
    $region20: #{ffnn_forward.1} parent=1 // pred_region
      _
    $region21: #{ffnn_forward.1} parent=1 // pred_fallthru
      _
    %v21 = vld [vmem:[%s4] sm:$0xff]
    %v22 = vld [vmem:[%s4 + $0x8] sm:$0xff]
    %v23 = vld [vmem:[%s4 + $0x10] sm:$0xff]
    %v24 = vld [vmem:[%s4 + $0x18] sm:$0xff]
    %v25 = vld [vmem:[%s1] sm:$0xff]
    %v26 = vld [vmem:[%s1 + $0x8] sm:$0xff]
    %v27 = vld [vmem:[%s1 + $0x10] sm:$0xff]
    %v28 = vld [vmem:[%s1 + $0x18] sm:$0xff]
    %v29 = vld [vmem:[%s0] sm:$0xff]
    %v30 = vld [vmem:[%s0 + $0x8] sm:$0xff]
    %v31 = vld [vmem:[%s0 + $0x10] sm:$0xff]
    %v32 = vld [vmem:[%s0 + $0x18] sm:$0xff]
    %v33 = vld [vmem:[%s0 + $0x20] sm:$0xff]
    %v34 = vld [vmem:[%s0 + $0x28] sm:$0xff]
    %v35 = vld [vmem:[%s0 + $0x30] sm:$0xff]
    %v36 = vld [vmem:[%s0 + $0x38] sm:$0xff]
    %38 = vset.pattern.permute.xlu0 0
    %39 = vperm.xlu0 %38, %v21
    %v40 = vpop.permute.xlu0 %39
    %43 = vset.pattern.permute.xlu0 0
    %44 = vperm.xlu0 %43, %v22
    %v45 = vpop.permute.xlu0 %44
    %48 = vset.pattern.permute.xlu0 0
    %49 = vperm.xlu0 %48, %v23
    %v50 = vpop.permute.xlu0 %49
    %53 = vset.pattern.permute.xlu0 0
    %54 = vperm.xlu0 %53, %v24
    %v55 = vpop.permute.xlu0 %54
    %vm57 = vcmask 130048
    %v59 = vsel %vm57, %v25, 0
    %v62 = vsel %vm57, %v26, 0
    %v65 = vsel %vm57, %v27, 0
    %v68 = vsel %vm57, %v28, 0
    %v71 = vsel %vm57, %v29, 0
    %v74 = vsel %vm57, %v30, 0
    %v77 = vsel %vm57, %v31, 0
    %v80 = vsel %vm57, %v32, 0
    %v83 = vsel %vm57, %v33, 0
    %v86 = vsel %vm57, %v34, 0
    %v89 = vsel %vm57, %v35, 0
    %v92 = vsel %vm57, %v36, 0
    %94 = vmatprep.subr.mxu0 0.0
    %95 = vmatpush1.xpose.msra.mxu0 0.0
    %96 = vmatprep.subr.mxu0 0.0
    %97 = vmatpush1.xpose.msra.mxu0 0.0
    %98 = vmatprep.subr.mxu0 0.0
    %99 = vmatpush1.xpose.msra.mxu0 0.0
    %100 = vmatprep.subr.mxu0 0.0
    %101 = vmatpush1.xpose.msra.mxu0 0.0
    %102 = vmatprep.subr.mxu0 0.0
    %103 = vmatpush1.xpose.msra.mxu0 0.0
    %104 = vmatprep.subr.mxu0 0.0
    %105 = vmatpush1.xpose.msra.mxu0 0.0
    %106 = vmatprep.subr.mxu0 0.0
    %107 = vmatpush1.xpose.msra.mxu0 0.0
    %108 = vmatprep.subr.mxu0 0.0
    %109 = vmatpush1.xpose.msra.mxu0 0.0
    %110 = vmatprep.subr.mxu0 0.0
    %111 = vmatpush1.xpose.msra.mxu0 %v92
    %112 = vmatprep.subr.mxu0 0.0
    %113 = vmatpush1.xpose.msra.mxu0 %v89
    %114 = vmatprep.subr.mxu0 0.0
    %115 = vmatpush1.xpose.msra.mxu0 %v86
    %116 = vmatprep.subr.mxu0 0.0
    %117 = vmatpush1.xpose.msra.mxu0 %v83
    %118 = vmatprep.subr.mxu0 0.0
    %119 = vmatpush1.xpose.msra.mxu0 %v80
    %120 = vmatprep.subr.mxu0 0.0
    %121 = vmatpush1.xpose.msra.mxu0 %v77
    %122 = vmatprep.subr.mxu0 0.0
    %123 = vmatpush1.xpose.msra.mxu0 %v74
    %124 = vmatprep.subr.mxu0 0.0
    %125 = vmatpush1.xpose.msra.mxu0 %v71
    %126 = vmatprep.subr.mxu0 0.0
    %127 = vmatpush2.xpose.msra.mxu0 0.0
    %128 = vmatprep.subr.mxu0 0.0
    %129 = vmatpush2.xpose.msra.mxu0 0.0
    %130 = vmatprep.subr.mxu0 0.0
    %131 = vmatpush2.xpose.msra.mxu0 0.0
    %132 = vmatprep.subr.mxu0 0.0
    %133 = vmatpush2.xpose.msra.mxu0 0.0
    %134 = vmatprep.subr.mxu0 0.0
    %135 = vmatpush2.xpose.msra.mxu0 0.0
    %136 = vmatprep.subr.mxu0 0.0
    %137 = vmatpush2.xpose.msra.mxu0 0.0
    %138 = vmatprep.subr.mxu0 0.0
    %139 = vmatpush2.xpose.msra.mxu0 0.0
    %140 = vmatprep.subr.mxu0 0.0
    %141 = vmatpush2.xpose.msra.mxu0 0.0
    %142 = vmatprep.subr.mxu0 0.0
    %143 = vmatpush2.xpose.msra.mxu0 0.0
    %144 = vmatprep.subr.mxu0 0.0
    %145 = vmatpush2.xpose.msra.mxu0 0.0
    %146 = vmatprep.subr.mxu0 0.0
    %147 = vmatpush2.xpose.msra.mxu0 0.0
    %148 = vmatprep.subr.mxu0 0.0
    %149 = vmatpush2.xpose.msra.mxu0 0.0
    %150 = vmatprep.subr.mxu0 0.0
    %151 = vmatpush2.xpose.msra.mxu0 0.0
    %152 = vmatprep.subr.mxu0 0.0
    %153 = vmatpush2.xpose.msra.mxu0 0.0
    %154 = vmatprep.subr.mxu0 0.0
    %155 = vmatpush2.xpose.msra.mxu0 0.0
    %156 = vmatprep.subr.mxu0 0.0
    %157 = vmatpush2.xpose.msra.mxu0 0.0
    %158 = vmatprep.mubr.f32.mxu0 0.0
    %159 = vmatmul.mubr.f32.gmra.mxu0 %v59
    %v160 = vpop.f32.mrf.mxu0
    %v161 = vadd.f32 %v40, %v160
    %v162 = vpop.f32.mrf.mxu0
    %163 = vmatprep.mubr.f32.mxu0 0.0
    %164 = vmatmul.mubr.f32.gmra.mxu0 %v62
    %v165 = vpop.f32.mrf.mxu0
    %v166 = vadd.f32 %v45, %v165
    %v167 = vpop.f32.mrf.mxu0
    %168 = vmatprep.mubr.f32.mxu0 0.0
    %169 = vmatmul.mubr.f32.gmra.mxu0 %v65
    %v170 = vpop.f32.mrf.mxu0
    %v171 = vadd.f32 %v50, %v170
    %v172 = vpop.f32.mrf.mxu0
    %173 = vmatprep.mubr.f32.mxu0 0.0
    %174 = vmatmul.mubr.f32.gmra.mxu0 %v68
    %v175 = vpop.f32.mrf.mxu0
    %v176 = vadd.f32 %v55, %v175
    %v177 = vpop.f32.mrf.mxu0
    %178 = vdwg.mxu0
    %v179 = vmax.f32 %v161, 0.0
    %v180 = vmax.f32 %v166, 0.0
    %v181 = vmax.f32 %v171, 0.0
    %v182 = vmax.f32 %v176, 0.0
    %v183 = vld [vmem:[%s2] sm:$0xff]
    %v184 = vld [vmem:[%s2 + $0x8] sm:$0xff]
    %v185 = vld [vmem:[%s2 + $0x10] sm:$0xff]
    %v186 = vld [vmem:[%s2 + $0x18] sm:$0xff]
    %187 = vset.pattern.permute.xlu0 1
    %188 = vperm.xlu0 %187, %v21
    %v189 = vpop.permute.xlu0 %188
    %191 = vset.pattern.permute.xlu0 1
    %192 = vperm.xlu0 %191, %v22
    %v193 = vpop.permute.xlu0 %192
    %195 = vset.pattern.permute.xlu0 1
    %196 = vperm.xlu0 %195, %v23
    %v197 = vpop.permute.xlu0 %196
    %199 = vset.pattern.permute.xlu0 1
    %200 = vperm.xlu0 %199, %v24
    %v201 = vpop.permute.xlu0 %200
    %vm203 = vcmask 261120
    %v205 = vsel %vm203, %v183, 0
    %v208 = vsel %vm203, %v184, 0
    %v211 = vsel %vm203, %v185, 0
    %v214 = vsel %vm203, %v186, 0
    %216 = vmatprep.subr.mxu0 0.0
    %217 = vmatpush1.msra.mxu0 0.0
    %218 = vmatprep.subr.mxu0 0.0
    %219 = vmatpush1.msra.mxu0 0.0
    %220 = vmatprep.subr.mxu0 0.0
    %221 = vmatpush1.msra.mxu0 0.0
    %222 = vmatprep.subr.mxu0 0.0
    %223 = vmatpush1.msra.mxu0 0.0
    %224 = vmatprep.subr.mxu0 0.0
    %225 = vmatpush1.msra.mxu0 0.0
    %226 = vmatprep.subr.mxu0 0.0
    %227 = vmatpush1.msra.mxu0 0.0
    %228 = vmatprep.subr.mxu0 0.0
    %229 = vmatpush1.msra.mxu0 0.0
    %230 = vmatprep.subr.mxu0 0.0
    %231 = vmatpush1.msra.mxu0 0.0
    %232 = vmatprep.subr.mxu0 0.0
    %233 = vmatpush1.msra.mxu0 0.0
    %234 = vmatprep.subr.mxu0 0.0
    %235 = vmatpush1.msra.mxu0 0.0
    %236 = vmatprep.subr.mxu0 0.0
    %237 = vmatpush1.msra.mxu0 0.0
    %238 = vmatprep.subr.mxu0 0.0
    %239 = vmatpush1.msra.mxu0 0.0
    %240 = vmatprep.subr.mxu0 0.0
    %241 = vmatpush1.msra.mxu0 %v182
    %242 = vmatprep.subr.mxu0 0.0
    %243 = vmatpush1.msra.mxu0 %v181
    %244 = vmatprep.subr.mxu0 0.0
    %245 = vmatpush1.msra.mxu0 %v180
    %246 = vmatprep.subr.mxu0 0.0
    %247 = vmatpush1.msra.mxu0 %v179
    %248 = vmatprep.subr.mxu0 0.0
    %249 = vmatpush2.msra.mxu0 0.0
    %250 = vmatprep.subr.mxu0 0.0
    %251 = vmatpush2.msra.mxu0 0.0
    %252 = vmatprep.subr.mxu0 0.0
    %253 = vmatpush2.msra.mxu0 0.0
    %254 = vmatprep.subr.mxu0 0.0
    %255 = vmatpush2.msra.mxu0 0.0
    %256 = vmatprep.subr.mxu0 0.0
    %257 = vmatpush2.msra.mxu0 0.0
    %258 = vmatprep.subr.mxu0 0.0
    %259 = vmatpush2.msra.mxu0 0.0
    %260 = vmatprep.subr.mxu0 0.0
    %261 = vmatpush2.msra.mxu0 0.0
    %262 = vmatprep.subr.mxu0 0.0
    %263 = vmatpush2.msra.mxu0 0.0
    %264 = vmatprep.subr.mxu0 0.0
    %265 = vmatpush2.msra.mxu0 0.0
    %266 = vmatprep.subr.mxu0 0.0
    %267 = vmatpush2.msra.mxu0 0.0
    %268 = vmatprep.subr.mxu0 0.0
    %269 = vmatpush2.msra.mxu0 0.0
    %270 = vmatprep.subr.mxu0 0.0
    %271 = vmatpush2.msra.mxu0 0.0
    %272 = vmatprep.subr.mxu0 0.0
    %273 = vmatpush2.msra.mxu0 0.0
    %274 = vmatprep.subr.mxu0 0.0
    %275 = vmatpush2.msra.mxu0 0.0
    %276 = vmatprep.subr.mxu0 0.0
    %277 = vmatpush2.msra.mxu0 0.0
    %278 = vmatprep.subr.mxu0 0.0
    %279 = vmatpush2.msra.mxu0 0.0
    %280 = vmatprep.mubr.f32.mxu0 0.0
    %281 = vmatmul.mubr.f32.gmra.mxu0 %v205
    %v282 = vpop.f32.mrf.mxu0
    %v283 = vadd.f32 %v189, %v282
    %v284 = vpop.f32.mrf.mxu0
    %285 = vmatprep.mubr.f32.mxu0 0.0
    %286 = vmatmul.mubr.f32.gmra.mxu0 %v208
    %v287 = vpop.f32.mrf.mxu0
    %v288 = vadd.f32 %v193, %v287
    %v289 = vpop.f32.mrf.mxu0
    %290 = vmatprep.mubr.f32.mxu0 0.0
    %291 = vmatmul.mubr.f32.gmra.mxu0 %v211
    %v292 = vpop.f32.mrf.mxu0
    %v293 = vadd.f32 %v197, %v292
    %v294 = vpop.f32.mrf.mxu0
    %295 = vmatprep.mubr.f32.mxu0 0.0
    %296 = vmatmul.mubr.f32.gmra.mxu0 %v214
    %v297 = vpop.f32.mrf.mxu0
    %v298 = vadd.f32 %v201, %v297
    %v299 = vpop.f32.mrf.mxu0
    %300 = vdwg.mxu0
    %v301 = vmax.f32 %v283, 0.0
    %v302 = vmax.f32 %v288, 0.0
    %v303 = vmax.f32 %v293, 0.0
    %v304 = vmax.f32 %v298, 0.0
    %v305 = vld [vmem:[%s3] sm:$0xff]
    %v306 = vld [vmem:[%s3 + $0x8] sm:$0xff]
    %v307 = vld [vmem:[%s3 + $0x10] sm:$0xff]
    %v308 = vld [vmem:[%s3 + $0x18] sm:$0xff]
    %309 = vset.pattern.permute.xlu0 2
    %310 = vperm.xlu0 %309, %v21
    %v311 = vpop.permute.xlu0 %310
    %313 = vset.pattern.permute.xlu0 2
    %314 = vperm.xlu0 %313, %v22
    %v315 = vpop.permute.xlu0 %314
    %317 = vset.pattern.permute.xlu0 2
    %318 = vperm.xlu0 %317, %v23
    %v319 = vpop.permute.xlu0 %318
    %321 = vset.pattern.permute.xlu0 2
    %322 = vperm.xlu0 %321, %v24
    %v323 = vpop.permute.xlu0 %322
    %v326 = vsel %vm203, %v305, 0
    %v329 = vsel %vm203, %v306, 0
    %v332 = vsel %vm203, %v307, 0
    %v335 = vsel %vm203, %v308, 0
    %337 = vmatprep.subr.mxu0 0.0
    %338 = vmatpush1.msra.mxu0 0.0
    %339 = vmatprep.subr.mxu0 0.0
    %340 = vmatpush1.msra.mxu0 0.0
    %341 = vmatprep.subr.mxu0 0.0
    %342 = vmatpush1.msra.mxu0 0.0
    %343 = vmatprep.subr.mxu0 0.0
    %344 = vmatpush1.msra.mxu0 0.0
    %345 = vmatprep.subr.mxu0 0.0
    %346 = vmatpush1.msra.mxu0 0.0
    %347 = vmatprep.subr.mxu0 0.0
    %348 = vmatpush1.msra.mxu0 0.0
    %349 = vmatprep.subr.mxu0 0.0
    %350 = vmatpush1.msra.mxu0 0.0
    %351 = vmatprep.subr.mxu0 0.0
    %352 = vmatpush1.msra.mxu0 0.0
    %353 = vmatprep.subr.mxu0 0.0
    %354 = vmatpush1.msra.mxu0 0.0
    %355 = vmatprep.subr.mxu0 0.0
    %356 = vmatpush1.msra.mxu0 0.0
    %357 = vmatprep.subr.mxu0 0.0
    %358 = vmatpush1.msra.mxu0 0.0
    %359 = vmatprep.subr.mxu0 0.0
    %360 = vmatpush1.msra.mxu0 0.0
    %361 = vmatprep.subr.mxu0 0.0
    %362 = vmatpush1.msra.mxu0 %v304
    %363 = vmatprep.subr.mxu0 0.0
    %364 = vmatpush1.msra.mxu0 %v303
    %365 = vmatprep.subr.mxu0 0.0
    %366 = vmatpush1.msra.mxu0 %v302
    %367 = vmatprep.subr.mxu0 0.0
    %368 = vmatpush1.msra.mxu0 %v301
    %369 = vmatprep.subr.mxu0 0.0
    %370 = vmatpush2.msra.mxu0 0.0
    %371 = vmatprep.subr.mxu0 0.0
    %372 = vmatpush2.msra.mxu0 0.0
    %373 = vmatprep.subr.mxu0 0.0
    %374 = vmatpush2.msra.mxu0 0.0
    %375 = vmatprep.subr.mxu0 0.0
    %376 = vmatpush2.msra.mxu0 0.0
    %377 = vmatprep.subr.mxu0 0.0
    %378 = vmatpush2.msra.mxu0 0.0
    %379 = vmatprep.subr.mxu0 0.0
    %380 = vmatpush2.msra.mxu0 0.0
    %381 = vmatprep.subr.mxu0 0.0
    %382 = vmatpush2.msra.mxu0 0.0
    %383 = vmatprep.subr.mxu0 0.0
    %384 = vmatpush2.msra.mxu0 0.0
    %385 = vmatprep.subr.mxu0 0.0
    %386 = vmatpush2.msra.mxu0 0.0
    %387 = vmatprep.subr.mxu0 0.0
    %388 = vmatpush2.msra.mxu0 0.0
    %389 = vmatprep.subr.mxu0 0.0
    %390 = vmatpush2.msra.mxu0 0.0
    %391 = vmatprep.subr.mxu0 0.0
    %392 = vmatpush2.msra.mxu0 0.0
    %393 = vmatprep.subr.mxu0 0.0
    %394 = vmatpush2.msra.mxu0 0.0
    %395 = vmatprep.subr.mxu0 0.0
    %396 = vmatpush2.msra.mxu0 0.0
    %397 = vmatprep.subr.mxu0 0.0
    %398 = vmatpush2.msra.mxu0 0.0
    %399 = vmatprep.subr.mxu0 0.0
    %400 = vmatpush2.msra.mxu0 0.0
    %401 = vmatprep.mubr.f32.mxu0 0.0
    %402 = vmatmul.mubr.f32.gmra.mxu0 %v326
    %v403 = vpop.f32.mrf.mxu0
    %v404 = vadd.f32 %v311, %v403
    %v405 = vpop.f32.mrf.mxu0
    %406 = vmatprep.mubr.f32.mxu0 0.0
    %407 = vmatmul.mubr.f32.gmra.mxu0 %v329
    %v408 = vpop.f32.mrf.mxu0
    %v409 = vadd.f32 %v315, %v408
    %v410 = vpop.f32.mrf.mxu0
    %411 = vmatprep.mubr.f32.mxu0 0.0
    %412 = vmatmul.mubr.f32.gmra.mxu0 %v332
    %v413 = vpop.f32.mrf.mxu0
    %v414 = vadd.f32 %v319, %v413
    %v415 = vpop.f32.mrf.mxu0
    %416 = vmatprep.mubr.f32.mxu0 0.0
    %417 = vmatmul.mubr.f32.gmra.mxu0 %v335
    %v418 = vpop.f32.mrf.mxu0
    %v419 = vadd.f32 %v323, %v418
    %v420 = vpop.f32.mrf.mxu0
    %421 = vdwg.mxu0
    %v422 = vmax.f32 %v404, 0.0
    %v423 = vmax.f32 %v409, 0.0
    %v424 = vmax.f32 %v414, 0.0
    %v425 = vmax.f32 %v419, 0.0
    %426 = vset.pattern.permute.xlu0 3
    %427 = vperm.xlu0 %426, %v21
    %v428 = vpop.permute.xlu0 %427
    %430 = vset.pattern.permute.xlu0 3
    %431 = vperm.xlu0 %430, %v22
    %v432 = vpop.permute.xlu0 %431
    %434 = vset.pattern.permute.xlu0 3
    %435 = vperm.xlu0 %434, %v23
    %v436 = vpop.permute.xlu0 %435
    %438 = vset.pattern.permute.xlu0 3
    %439 = vperm.xlu0 %438, %v24
    %v440 = vpop.permute.xlu0 %439
    %v442 = vmul.f32 %v422, %v428
    %v443 = vmul.f32 %v423, %v432
    %v444 = vmul.f32 %v424, %v436
    %v445 = vmul.f32 %v425, %v440
    %vm446 = vcmask 523264
    %v447 = vsel %vm446, %v442, 0.0
    %v448 = vsel %vm446, %v443, 0.0
    %v449 = vadd.f32 %v447, %v448
    %v450 = vsel %vm446, %v444, 0.0
    %v451 = vadd.f32 %v449, %v450
    %v452 = vsel %vm446, %v445, 0.0
    %v453 = vadd.f32 %v451, %v452
    %v454 = vrot.slane %v453, 4
    %v455 = vadd.f32 %v453, %v454
    %v456 = vrot.slane %v455, 2
    %v457 = vadd.f32 %v455, %v456
    %v458 = vrot.slane %v457, 1
    %v459 = vadd.f32 %v457, %v458
    %460 = vset.pattern.permute.xlu0 4
    %461 = vperm.xlu0 %460, %v21
    %v462 = vpop.permute.xlu0 %461
    %v464 = vadd.f32 %v459, %v462
    %v465 = vsub.f32 0.0, %v464
    %v466 = vmul.f32 %v465, 1.442695
    %v467 = vpow.pop %v466
    %v468 = vadd.f32 %v467, 1.0
    %v469 = vrcp.pop %v468
    %vm470 = vcmask 516096
    %471 = vst.msk [vmem:[#allocation2] sm:$0x1] %vm470, %v469
    // Predicated region
    $region22: #{ffnn_forward.1} parent=1 // pred_check
      _
    $region23: #{ffnn_forward.1} parent=1 // pred_check_branch
      %473 = sbr.rel (0) target = $region25
    $region24: #{ffnn_forward.1} parent=1 // pred_region
      %s475 = ssub.s32 16, 16
      %476 = vsyncadd [#allocation3], %s475
      %s478 = sshll.u32 [#allocation2], 4
      %s479 = int_to_ptr.vmem [resolvable:$true] %s478
      %481 = dma.vmem_to_hbm [thread:$0]  %s479, 16, %s5, [#allocation3]
    $region25: #{ffnn_forward.1} parent=1 // pred_fallthru
      _
    // Predicated region
    $region26: #{ffnn_forward.1} parent=1 // pred_check
      _
    $region27: #{ffnn_forward.1} parent=1 // pred_check_branch
      %483 = sbr.rel (0) target = $region29
    $region28: #{ffnn_forward.1} parent=1 // pred_region
      %484 = dma.done [#allocation3], 16
    $region29: #{ffnn_forward.1} parent=1 // pred_fallthru
      _
    %485 = vsyncpa [#allocation3], 1

</llo_original>
